<compile_context>
chip_gen: v5e
topology: v5e:2x2
jax: 0.10.0
libtpu: 0.0.40
codegen_flags: <defaults>
</compile_context>

<pallas_src>
import functools

import jax
import jax.numpy as jnp
from jax.experimental import pallas as pl
from jax.experimental.pallas import tpu as pltpu

NEG_SLOPE = 0.01


def _leaky_relu(x, ns):
    return jnp.where(x >= 0.0, x, ns * x)


def _softplus(x):
    # numerically stable softplus: max(x,0) + log1p(exp(-|x|))
    return jnp.maximum(x, 0.0) + jnp.log1p(jnp.exp(-jnp.abs(x)))


def _round_up(x, m):
    return ((x + m - 1) // m) * m


# -----------------------------------------------------------------------------
# Kernel
# -----------------------------------------------------------------------------
def tarnet_kernel(feats_ref, t_ref,
                  w_in_ref, w_r1_ref, w_fa_ref, w_fs_ref, w_bd_ref, w_gmm_ref,
                  b_stack_ref, b_gmm_ref,
                  out_ref, *, dim_hidden, dim_output):
    ns = NEG_SLOPE
    H = dim_hidden
    H2 = H // 2
    K = dim_output

    x = feats_ref[...]                      # [TB, D]
    t = t_ref[...]                          # [TB, 1]
    one_minus_t = 1.0 - t                   # hoisted blend factor

    b_in = b_stack_ref[0:1, :]              # [1, H]
    b_r1 = b_stack_ref[1:2, :]              # [1, H]
    b_first = b_stack_ref[2:3, :]           # [1, 2*H2]
    b_bd = b_stack_ref[3:4, :]              # [1, 2*H2]

    def mm(a, w_ref):
        return jnp.dot(a, w_ref[...], preferred_element_type=jnp.float32)

    # ---------------- encoder (dense resnet, activate_output=False) ----------
    h = mm(x, w_in_ref) + b_in                                   # D -> H
    h = h + mm(_leaky_relu(h, ns), w_r1_ref) + b_r1              # ResidualDense H->H

    # ---------------- t0 / t1 heads, fused side-by-side ----------------------
    # columns [0:H2] = t0 branch, [H2:2*H2] = t1 branch
    h_act = _leaky_relu(h, ns)
    h01 = mm(h_act, w_fa_ref) + mm(h, w_fs_ref) + b_first        # ResidualDense H->H2 (x2)
    h01 = h01 + mm(_leaky_relu(h01, ns), w_bd_ref) + b_bd        # block-diag ResidualDense
    phi01 = _leaky_relu(h01, ns)

    phi0 = phi01[:, :H2]
    phi1 = phi01[:, H2:]
    phi = one_minus_t * phi0 + t * phi1                          # [TB, H2]

    # ---------------- SplitGMM: one fused [H2, 6K] head ----------------------
    # column order: [pi0 | mu0 | sg0 | pi1 | mu1 | sg1]
    heads = mm(phi, w_gmm_ref) + b_gmm_ref[...]                  # [TB, 6K]
    head0 = heads[:, :3 * K]
    head1 = heads[:, 3 * K:]

    col = jax.lax.broadcasted_iota(jnp.int32, (head0.shape[0], 3 * K), 1)
    is_scale = col >= 2 * K                                      # scale columns only
    sel0 = jnp.where(is_scale, _softplus(head0), head0)
    sel1 = jnp.where(is_scale, _softplus(head1), head1)

    mixed = one_minus_t * sel0 + t * sel1
    out_ref[...] = mixed + jnp.where(is_scale, 1e-7, 0.0)        # [logits | loc | scale]


# -----------------------------------------------------------------------------
# Parameter init (per-layer, PyTorch-style) and host-side packing/fusion
# -----------------------------------------------------------------------------
def init_params(key, dim_input, dim_hidden, dim_output):
    H, H2, K = dim_hidden, dim_hidden // 2, dim_output
    shapes = {
        "w_in": (dim_input, H), "b_in": (1, H),
        "w_r1": (H, H), "b_r1": (1, H),
        "w_t0a": (H, H2), "b_t0a": (1, H2),
        "w_t0s": (H, H2), "b_t0s": (1, H2),
        "w_t0b": (H2, H2), "b_t0b": (1, H2),
        "w_t1a": (H, H2), "b_t1a": (1, H2),
        "w_t1s": (H, H2), "b_t1s": (1, H2),
        "w_t1b": (H2, H2), "b_t1b": (1, H2),
        "w_pi0": (H2, K), "b_pi0": (1, K),
        "w_mu0": (H2, K), "b_mu0": (1, K),
        "w_sg0": (H2, K), "b_sg0": (1, K),
        "w_pi1": (H2, K), "b_pi1": (1, K),
        "w_mu1": (H2, K), "b_mu1": (1, K),
        "w_sg1": (H2, K), "b_sg1": (1, K),
    }
    keys = jax.random.split(key, len(shapes))
    params = {}
    for (name, shp), k in zip(shapes.items(), keys):
        params[name] = (0.1 * jax.random.normal(k, shp)).astype(jnp.float32)
    return params


def pack_params(params, dim_hidden, dim_output):
    """Fuse the per-layer parameters into 8 lane-dense arrays (host side)."""
    H, H2, K = dim_hidden, dim_hidden // 2, dim_output
    assert H == 2 * H2

    # t0/t1 first-stage ResidualDense, fused side-by-side.
    w_fa = jnp.concatenate([params["w_t0a"], params["w_t1a"]], axis=1)     # [H, 2*H2]
    w_fs = jnp.concatenate([params["w_t0s"], params["w_t1s"]], axis=1)     # [H, 2*H2]
    b_first = jnp.concatenate([params["b_t0a"] + params["b_t0s"],
                               params["b_t1a"] + params["b_t1s"]], axis=1)  # [1, 2*H2]

    # second-stage ResidualDense as a block-diagonal matrix.
    w_bd = jnp.zeros((2 * H2, 2 * H2), jnp.float32)
    w_bd = w_bd.at[:H2, :H2].set(params["w_t0b"]).at[H2:, H2:].set(params["w_t1b"])
    b_bd = jnp.concatenate([params["b_t0b"], params["b_t1b"]], axis=1)      # [1, 2*H2]

    # SplitGMM: six heads fused into one [H2, 6K] weight.
    w_gmm = jnp.concatenate([params["w_pi0"], params["w_mu0"], params["w_sg0"],
                             params["w_pi1"], params["w_mu1"], params["w_sg1"]],
                            axis=1)                                          # [H2, 6K]
    b_gmm = jnp.concatenate([params["b_pi0"], params["b_mu0"], params["b_sg0"],
                             params["b_pi1"], params["b_mu1"], params["b_sg1"]],
                            axis=1)                                          # [1, 6K]

    # All H-wide biases stacked into a single [4, H] blob.
    b_stack = jnp.concatenate([params["b_in"], params["b_r1"], b_first, b_bd],
                              axis=0)                                        # [4, H]

    return dict(w_in=params["w_in"], w_r1=params["w_r1"],
                w_fa=w_fa, w_fs=w_fs, w_bd=w_bd, w_gmm=w_gmm,
                b_stack=b_stack, b_gmm=b_gmm)


# -----------------------------------------------------------------------------
# Wrapper
# -----------------------------------------------------------------------------
def tarnet_forward(x, params, dim_hidden, dim_output, *, tile_b=256):
    B, Dp1 = x.shape
    D = Dp1 - 1
    H, H2, K = dim_hidden, dim_hidden // 2, dim_output

    # Host-side split of features / treatment (no in-kernel lane slicing of x).
    feats = x[:, :D].astype(jnp.float32)
    t = x[:, D:D + 1].astype(jnp.float32)

    # Batch tile: multiple of 8 sublanes, capped by (padded) batch.
    tile_b = min(_round_up(tile_b, 8), _round_up(B, 8))
    B_pad = _round_up(B, tile_b)
    if B_pad != B:
        feats = jnp.pad(feats, ((0, B_pad - B), (0, 0)))
        t = jnp.pad(t, ((0, B_pad - B), (0, 0)))

    packed = pack_params(params, H, K)
    grid = (pl.cdiv(B_pad, tile_b),)

    in_specs = [
        pl.BlockSpec((tile_b, D), lambda i: (i, 0)),            # feats (batch-tiled)
        pl.BlockSpec((tile_b, 1), lambda i: (i, 0)),            # t     (batch-tiled)
        pl.BlockSpec((D, H), lambda i: (0, 0)),                 # w_in   (resident)
        pl.BlockSpec((H, H), lambda i: (0, 0)),                 # w_r1   (resident)
        pl.BlockSpec((H, 2 * H2), lambda i: (0, 0)),            # w_fa   (resident)
        pl.BlockSpec((H, 2 * H2), lambda i: (0, 0)),            # w_fs   (resident)
        pl.BlockSpec((2 * H2, 2 * H2), lambda i: (0, 0)),       # w_bd   (resident)
        pl.BlockSpec((H2, 6 * K), lambda i: (0, 0)),            # w_gmm  (resident)
        pl.BlockSpec((4, H), lambda i: (0, 0)),                 # b_stack(resident)
        pl.BlockSpec((1, 6 * K), lambda i: (0, 0)),             # b_gmm  (resident)
    ]
    out_specs = pl.BlockSpec((tile_b, 3 * K), lambda i: (i, 0))
    out_shape = jax.ShapeDtypeStruct((B_pad, 3 * K), jnp.float32)

    kernel = functools.partial(tarnet_kernel, dim_hidden=H, dim_output=K)

    fused = pl.pallas_call(
        kernel,
        out_shape=out_shape,
        grid=grid,
        in_specs=in_specs,
        out_specs=out_specs,
        compiler_params=pltpu.CompilerParams(
            dimension_semantics=("parallel",),      # megacore-shard the batch axis
            vmem_limit_bytes=32 * 1024 * 1024),     # explicit, safe on v5e/v6e/v7x
    )(feats, t,
      packed["w_in"], packed["w_r1"], packed["w_fa"], packed["w_fs"],
      packed["w_bd"], packed["w_gmm"], packed["b_stack"], packed["b_gmm"])

    # Free XLA slices back to the three GMM parameter tensors.
    logits = fused[:B, :K]
    loc = fused[:B, K:2 * K]
    scale = fused[:B, 2 * K:3 * K]
    return logits, loc, scale


# -----------------------------------------------------------------------------
# Pure-JAX reference (mirrors the PyTorch module, unfused parameters)
# -----------------------------------------------------------------------------
def tarnet_reference(x, params):
    ns = NEG_SLOPE
    D = x.shape[1] - 1
    feats, t = x[:, :D], x[:, D:D + 1]

    def lin(h, w, b):
        return h @ params[w] + params[b]

    lrelu = lambda v: jnp.where(v >= 0.0, v, ns * v)

    h = lin(feats, "w_in", "b_in")
    h = h + lin(lrelu(h), "w_r1", "b_r1")

    h0 = lin(lrelu(h), "w_t0a", "b_t0a") + lin(h, "w_t0s", "b_t0s")
    h0 = h0 + lin(lrelu(h0), "w_t0b", "b_t0b")
    phi0 = lrelu(h0)

    h1 = lin(lrelu(h), "w_t1a", "b_t1a") + lin(h, "w_t1s", "b_t1s")
    h1 = h1 + lin(lrelu(h1), "w_t1b", "b_t1b")
    phi1 = lrelu(h1)

    phi = (1.0 - t) * phi0 + t * phi1
    logits = (1.0 - t) * (phi @ params["w_pi0"] + params["b_pi0"]) \
        + t * (phi @ params["w_pi1"] + params["b_pi1"])
    loc = (1.0 - t) * (phi @ params["w_mu0"] + params["b_mu0"]) \
        + t * (phi @ params["w_mu1"] + params["b_mu1"])
    scale = (1.0 - t) * _softplus(phi @ params["w_sg0"] + params["b_sg0"]) \
        + t * _softplus(phi @ params["w_sg1"] + params["b_sg1"]) + 1e-7
    return logits, loc, scale


if __name__ == "__main__":
    B = 64          # batch
    D = 16          # feature dim (dim_input of TARNet)
    H = 32          # dim_hidden
    K = 8           # dim_output (number of mixture components)

    key = jax.random.PRNGKey(0)
    k_feat, k_t, k_params = jax.random.split(key, 3)

    feats = jax.random.normal(k_feat, (B, D), dtype=jnp.float32)
    t = jax.random.bernoulli(k_t, 0.5, (B, 1)).astype(jnp.float32)
    x = jnp.concatenate([feats, t], axis=-1)          # [B, D+1]

    params = init_params(k_params, D, H, K)

    # tile_b=32 -> grid of 2 batch tiles (exercises the pipelined parallel axis)
    logits, loc, scale = jax.block_until_ready(
        tarnet_forward(x, params, H, K, tile_b=32))

    ref_logits, ref_loc, ref_scale = tarnet_reference(x, params)

    assert logits.shape == (B, K) and loc.shape == (B, K) and scale.shape == (B, K)
    assert bool(jnp.all(scale > 0.0))
    assert bool(jnp.all(jnp.isfinite(logits))) and bool(jnp.all(jnp.isfinite(loc)))
    assert bool(jnp.allclose(logits, ref_logits, rtol=1e-5, atol=1e-5))
    assert bool(jnp.allclose(loc, ref_loc, rtol=1e-5, atol=1e-5))
    assert bool(jnp.allclose(scale, ref_scale, rtol=1e-5, atol=1e-5))
    print("KERNEL_OK")
</pallas_src>

<mosaic_0001>
module attributes {stable_mosaic.version = 11 : i64} {
  func.func @tarnet_kernel(%arg0: i32, %arg1: memref<32x16xf32, #tpu.memory_space<vmem>>, %arg2: memref<32x1xf32, #tpu.memory_space<vmem>>, %arg3: memref<16x32xf32, #tpu.memory_space<vmem>>, %arg4: memref<32x32xf32, #tpu.memory_space<vmem>>, %arg5: memref<32x32xf32, #tpu.memory_space<vmem>>, %arg6: memref<32x32xf32, #tpu.memory_space<vmem>>, %arg7: memref<32x32xf32, #tpu.memory_space<vmem>>, %arg8: memref<16x48xf32, #tpu.memory_space<vmem>>, %arg9: memref<4x32xf32, #tpu.memory_space<vmem>>, %arg10: memref<1x48xf32, #tpu.memory_space<vmem>>, %arg11: memref<32x24xf32, #tpu.memory_space<vmem>>) attributes {dimension_semantics = [#tpu.dimension_semantics<parallel>], iteration_bounds = array<i64: 2>, scalar_prefetch = 0 : i64, scratch_operands = 0 : i64, tpu.core_type = #tpu.core_type<tc>, window_params = [{transform_indices = @transform_0, window_bounds = array<i64: 32, 16>}, {transform_indices = @transform_1, window_bounds = array<i64: 32, 1>}, {pipeline_mode = #tpu.pipeline_mode<synchronous>, transform_indices = @transform_2, window_bounds = array<i64: 16, 32>}, {pipeline_mode = #tpu.pipeline_mode<synchronous>, transform_indices = @transform_3, window_bounds = array<i64: 32, 32>}, {pipeline_mode = #tpu.pipeline_mode<synchronous>, transform_indices = @transform_4, window_bounds = array<i64: 32, 32>}, {pipeline_mode = #tpu.pipeline_mode<synchronous>, transform_indices = @transform_5, window_bounds = array<i64: 32, 32>}, {pipeline_mode = #tpu.pipeline_mode<synchronous>, transform_indices = @transform_6, window_bounds = array<i64: 32, 32>}, {pipeline_mode = #tpu.pipeline_mode<synchronous>, transform_indices = @transform_7, window_bounds = array<i64: 16, 48>}, {pipeline_mode = #tpu.pipeline_mode<synchronous>, transform_indices = @transform_8, window_bounds = array<i64: 4, 32>}, {pipeline_mode = #tpu.pipeline_mode<synchronous>, transform_indices = @transform_9, window_bounds = array<i64: 1, 48>}, {transform_indices = @transform_10, window_bounds = array<i64: 32, 24>}]} {
    %c0 = arith.constant 0 : index
    %c0_0 = arith.constant 0 : index
    %0 = vector.load %arg1[%c0, %c0_0] : memref<32x16xf32, #tpu.memory_space<vmem>>, vector<32x16xf32>
    %c0_1 = arith.constant 0 : index
    %c0_2 = arith.constant 0 : index
    %1 = vector.load %arg2[%c0_1, %c0_2] : memref<32x1xf32, #tpu.memory_space<vmem>>, vector<32x1xf32>
    %cst = arith.constant 1.000000e+00 : f32
    %2 = vector.broadcast %cst : f32 to vector<32x1xf32>
    %3 = arith.subf %2, %1 : vector<32x1xf32>
    %c0_3 = arith.constant 0 : index
    %c0_4 = arith.constant 0 : index
    %4 = vector.load %arg9[%c0_3, %c0_4] : memref<4x32xf32, #tpu.memory_space<vmem>>, vector<1x32xf32>
    %c1 = arith.constant 1 : index
    %c0_5 = arith.constant 0 : index
    %5 = vector.load %arg9[%c1, %c0_5] : memref<4x32xf32, #tpu.memory_space<vmem>>, vector<1x32xf32>
    %c2 = arith.constant 2 : index
    %c0_6 = arith.constant 0 : index
    %6 = vector.load %arg9[%c2, %c0_6] : memref<4x32xf32, #tpu.memory_space<vmem>>, vector<1x32xf32>
    %c3 = arith.constant 3 : index
    %c0_7 = arith.constant 0 : index
    %7 = vector.load %arg9[%c3, %c0_7] : memref<4x32xf32, #tpu.memory_space<vmem>>, vector<1x32xf32>
    %c0_8 = arith.constant 0 : index
    %c0_9 = arith.constant 0 : index
    %8 = vector.load %arg3[%c0_8, %c0_9] : memref<16x32xf32, #tpu.memory_space<vmem>>, vector<16x32xf32>
    %cst_10 = arith.constant dense<0.000000e+00> : vector<32x32xf32>
    %9 = tpu.matmul %0, %8, %cst_10 {dimension_numbers = #tpu.dot_dimension_numbers<[1], [0], [0], [1], [0, 0, 1, 1], [], []>} : vector<32x16xf32>, vector<16x32xf32>, vector<32x32xf32> -> vector<32x32xf32>
    %10 = vector.broadcast %4 : vector<1x32xf32> to vector<32x32xf32>
    %11 = arith.addf %9, %10 : vector<32x32xf32>
    %cst_11 = arith.constant 0.000000e+00 : f32
    %12 = vector.broadcast %cst_11 : f32 to vector<32x32xf32>
    %13 = arith.cmpf oge, %11, %12 : vector<32x32xf32>
    %cst_12 = arith.constant 0.00999999977 : f32
    %14 = vector.broadcast %cst_12 : f32 to vector<32x32xf32>
    %15 = arith.mulf %14, %11 : vector<32x32xf32>
    %16 = arith.select %13, %11, %15 : vector<32x32xi1>, vector<32x32xf32>
    %c0_13 = arith.constant 0 : index
    %c0_14 = arith.constant 0 : index
    %17 = vector.load %arg4[%c0_13, %c0_14] : memref<32x32xf32, #tpu.memory_space<vmem>>, vector<32x32xf32>
    %cst_15 = arith.constant dense<0.000000e+00> : vector<32x32xf32>
    %18 = tpu.matmul %16, %17, %cst_15 {dimension_numbers = #tpu.dot_dimension_numbers<[1], [0], [0], [1], [0, 0, 1, 1], [], []>} : vector<32x32xf32>, vector<32x32xf32>, vector<32x32xf32> -> vector<32x32xf32>
    %19 = arith.addf %11, %18 : vector<32x32xf32>
    %20 = vector.broadcast %5 : vector<1x32xf32> to vector<32x32xf32>
    %21 = arith.addf %19, %20 : vector<32x32xf32>
    %cst_16 = arith.constant 0.000000e+00 : f32
    %22 = vector.broadcast %cst_16 : f32 to vector<32x32xf32>
    %23 = arith.cmpf oge, %21, %22 : vector<32x32xf32>
    %cst_17 = arith.constant 0.00999999977 : f32
    %24 = vector.broadcast %cst_17 : f32 to vector<32x32xf32>
    %25 = arith.mulf %24, %21 : vector<32x32xf32>
    %26 = arith.select %23, %21, %25 : vector<32x32xi1>, vector<32x32xf32>
    %c0_18 = arith.constant 0 : index
    %c0_19 = arith.constant 0 : index
    %27 = vector.load %arg5[%c0_18, %c0_19] : memref<32x32xf32, #tpu.memory_space<vmem>>, vector<32x32xf32>
    %cst_20 = arith.constant dense<0.000000e+00> : vector<32x32xf32>
    %28 = tpu.matmul %26, %27, %cst_20 {dimension_numbers = #tpu.dot_dimension_numbers<[1], [0], [0], [1], [0, 0, 1, 1], [], []>} : vector<32x32xf32>, vector<32x32xf32>, vector<32x32xf32> -> vector<32x32xf32>
    %c0_21 = arith.constant 0 : index
    %c0_22 = arith.constant 0 : index
    %29 = vector.load %arg6[%c0_21, %c0_22] : memref<32x32xf32, #tpu.memory_space<vmem>>, vector<32x32xf32>
    %cst_23 = arith.constant dense<0.000000e+00> : vector<32x32xf32>
    %30 = tpu.matmul %21, %29, %cst_23 {dimension_numbers = #tpu.dot_dimension_numbers<[1], [0], [0], [1], [0, 0, 1, 1], [], []>} : vector<32x32xf32>, vector<32x32xf32>, vector<32x32xf32> -> vector<32x32xf32>
    %31 = arith.addf %28, %30 : vector<32x32xf32>
    %32 = vector.broadcast %6 : vector<1x32xf32> to vector<32x32xf32>
    %33 = arith.addf %31, %32 : vector<32x32xf32>
    %cst_24 = arith.constant 0.000000e+00 : f32
    %34 = vector.broadcast %cst_24 : f32 to vector<32x32xf32>
    %35 = arith.cmpf oge, %33, %34 : vector<32x32xf32>
    %cst_25 = arith.constant 0.00999999977 : f32
    %36 = vector.broadcast %cst_25 : f32 to vector<32x32xf32>
    %37 = arith.mulf %36, %33 : vector<32x32xf32>
    %38 = arith.select %35, %33, %37 : vector<32x32xi1>, vector<32x32xf32>
    %c0_26 = arith.constant 0 : index
    %c0_27 = arith.constant 0 : index
    %39 = vector.load %arg7[%c0_26, %c0_27] : memref<32x32xf32, #tpu.memory_space<vmem>>, vector<32x32xf32>
    %cst_28 = arith.constant dense<0.000000e+00> : vector<32x32xf32>
    %40 = tpu.matmul %38, %39, %cst_28 {dimension_numbers = #tpu.dot_dimension_numbers<[1], [0], [0], [1], [0, 0, 1, 1], [], []>} : vector<32x32xf32>, vector<32x32xf32>, vector<32x32xf32> -> vector<32x32xf32>
    %41 = arith.addf %33, %40 : vector<32x32xf32>
    %42 = vector.broadcast %7 : vector<1x32xf32> to vector<32x32xf32>
    %43 = arith.addf %41, %42 : vector<32x32xf32>
    %cst_29 = arith.constant 0.000000e+00 : f32
    %44 = vector.broadcast %cst_29 : f32 to vector<32x32xf32>
    %45 = arith.cmpf oge, %43, %44 : vector<32x32xf32>
    %cst_30 = arith.constant 0.00999999977 : f32
    %46 = vector.broadcast %cst_30 : f32 to vector<32x32xf32>
    %47 = arith.mulf %46, %43 : vector<32x32xf32>
    %48 = arith.select %45, %43, %47 : vector<32x32xi1>, vector<32x32xf32>
    %49 = vector.extract_strided_slice %48 {offsets = [0, 0], sizes = [32, 16], strides = [1, 1]} : vector<32x32xf32> to vector<32x16xf32>
    %50 = vector.extract_strided_slice %48 {offsets = [0, 16], sizes = [32, 16], strides = [1, 1]} : vector<32x32xf32> to vector<32x16xf32>
    %51 = vector.broadcast %3 : vector<32x1xf32> to vector<32x16xf32>
    %52 = arith.mulf %51, %49 : vector<32x16xf32>
    %53 = vector.broadcast %1 : vector<32x1xf32> to vector<32x16xf32>
    %54 = arith.mulf %53, %50 : vector<32x16xf32>
    %55 = arith.addf %52, %54 : vector<32x16xf32>
    %c0_31 = arith.constant 0 : index
    %c0_32 = arith.constant 0 : index
    %56 = vector.load %arg8[%c0_31, %c0_32] : memref<16x48xf32, #tpu.memory_space<vmem>>, vector<16x48xf32>
    %cst_33 = arith.constant dense<0.000000e+00> : vector<32x48xf32>
    %57 = tpu.matmul %55, %56, %cst_33 {dimension_numbers = #tpu.dot_dimension_numbers<[1], [0], [0], [1], [0, 0, 1, 1], [], []>} : vector<32x16xf32>, vector<16x48xf32>, vector<32x48xf32> -> vector<32x48xf32>
    %c0_34 = arith.constant 0 : index
    %c0_35 = arith.constant 0 : index
    %58 = vector.load %arg10[%c0_34, %c0_35] : memref<1x48xf32, #tpu.memory_space<vmem>>, vector<1x48xf32>
    %59 = vector.broadcast %58 : vector<1x48xf32> to vector<32x48xf32>
    %60 = arith.addf %57, %59 : vector<32x48xf32>
    %61 = vector.extract_strided_slice %60 {offsets = [0, 0], sizes = [32, 24], strides = [1, 1]} : vector<32x48xf32> to vector<32x24xf32>
    %62 = vector.extract_strided_slice %60 {offsets = [0, 24], sizes = [32, 24], strides = [1, 1]} : vector<32x48xf32> to vector<32x24xf32>
    %63 = tpu.iota {dimensions = array<i32: 1>} : vector<32x24xi32>
    %c16_i32 = arith.constant 16 : i32
    %64 = vector.broadcast %c16_i32 : i32 to vector<32x24xi32>
    %65 = arith.cmpi sge, %63, %64 : vector<32x24xi32>
    %cst_36 = arith.constant 0.000000e+00 : f32
    %66 = vector.broadcast %cst_36 : f32 to vector<32x24xf32>
    %67 = arith.maximumf %61, %66 : vector<32x24xf32>
    %68 = math.absf %61 : vector<32x24xf32>
    %cst_37 = arith.constant 0.000000e+00 : f32
    %69 = vector.broadcast %cst_37 : f32 to vector<32x24xf32>
    %70 = arith.subf %69, %68 : vector<32x24xf32>
    %71 = math.exp %70 : vector<32x24xf32>
    %72 = math.log1p %71 : vector<32x24xf32>
    %73 = arith.addf %67, %72 : vector<32x24xf32>
    %74 = arith.select %65, %73, %61 : vector<32x24xi1>, vector<32x24xf32>
    %cst_38 = arith.constant 0.000000e+00 : f32
    %75 = vector.broadcast %cst_38 : f32 to vector<32x24xf32>
    %76 = arith.maximumf %62, %75 : vector<32x24xf32>
    %77 = math.absf %62 : vector<32x24xf32>
    %cst_39 = arith.constant 0.000000e+00 : f32
    %78 = vector.broadcast %cst_39 : f32 to vector<32x24xf32>
    %79 = arith.subf %78, %77 : vector<32x24xf32>
    %80 = math.exp %79 : vector<32x24xf32>
    %81 = math.log1p %80 : vector<32x24xf32>
    %82 = arith.addf %76, %81 : vector<32x24xf32>
    %83 = arith.select %65, %82, %62 : vector<32x24xi1>, vector<32x24xf32>
    %84 = vector.broadcast %3 : vector<32x1xf32> to vector<32x24xf32>
    %85 = arith.mulf %84, %74 : vector<32x24xf32>
    %86 = vector.broadcast %1 : vector<32x1xf32> to vector<32x24xf32>
    %87 = arith.mulf %86, %83 : vector<32x24xf32>
    %88 = arith.addf %85, %87 : vector<32x24xf32>
    %cst_40 = arith.constant 1.000000e-07 : f32
    %cst_41 = arith.constant 0.000000e+00 : f32
    %89 = vector.broadcast %cst_40 : f32 to vector<32x24xf32>
    %90 = vector.broadcast %cst_41 : f32 to vector<32x24xf32>
    %91 = arith.select %65, %89, %90 : vector<32x24xi1>, vector<32x24xf32>
    %92 = arith.addf %88, %91 : vector<32x24xf32>
    %c0_42 = arith.constant 0 : index
    %c0_43 = arith.constant 0 : index
    %93 = vector.load %arg11[%c0_42, %c0_43] : memref<32x24xf32, #tpu.memory_space<vmem>>, vector<32x24xf32>
    tpu.vector_store %arg11[%c0_42, %c0_43], %92 {strides = array<i32>} : memref<32x24xf32, #tpu.memory_space<vmem>>, vector<32x24xf32>,
    return
  }
  func.func @transform_0(%arg0: i32) -> (i32, i32) {
    %c0_i32 = arith.constant 0 : i32
    %c0_i32_0 = arith.constant 0 : i32
    return %arg0, %c0_i32 : i32, i32
  }
  func.func @transform_1(%arg0: i32) -> (i32, i32) {
    %c0_i32 = arith.constant 0 : i32
    %c0_i32_0 = arith.constant 0 : i32
    return %arg0, %c0_i32 : i32, i32
  }
  func.func @transform_2(%arg0: i32) -> (i32, i32) {
    %c0_i32 = arith.constant 0 : i32
    %c0_i32_0 = arith.constant 0 : i32
    %c0_i32_1 = arith.constant 0 : i32
    return %c0_i32, %c0_i32_0 : i32, i32
  }
  func.func @transform_3(%arg0: i32) -> (i32, i32) {
    %c0_i32 = arith.constant 0 : i32
    %c0_i32_0 = arith.constant 0 : i32
    %c0_i32_1 = arith.constant 0 : i32
    return %c0_i32, %c0_i32_0 : i32, i32
  }
  func.func @transform_4(%arg0: i32) -> (i32, i32) {
    %c0_i32 = arith.constant 0 : i32
    %c0_i32_0 = arith.constant 0 : i32
    %c0_i32_1 = arith.constant 0 : i32
    return %c0_i32, %c0_i32_0 : i32, i32
  }
  func.func @transform_5(%arg0: i32) -> (i32, i32) {
    %c0_i32 = arith.constant 0 : i32
    %c0_i32_0 = arith.constant 0 : i32
    %c0_i32_1 = arith.constant 0 : i32
    return %c0_i32, %c0_i32_0 : i32, i32
  }
  func.func @transform_6(%arg0: i32) -> (i32, i32) {
    %c0_i32 = arith.constant 0 : i32
    %c0_i32_0 = arith.constant 0 : i32
    %c0_i32_1 = arith.constant 0 : i32
    return %c0_i32, %c0_i32_0 : i32, i32
  }
  func.func @transform_7(%arg0: i32) -> (i32, i32) {
    %c0_i32 = arith.constant 0 : i32
    %c0_i32_0 = arith.constant 0 : i32
    %c0_i32_1 = arith.constant 0 : i32
    return %c0_i32, %c0_i32_0 : i32, i32
  }
  func.func @transform_8(%arg0: i32) -> (i32, i32) {
    %c0_i32 = arith.constant 0 : i32
    %c0_i32_0 = arith.constant 0 : i32
    %c0_i32_1 = arith.constant 0 : i32
    return %c0_i32, %c0_i32_0 : i32, i32
  }
  func.func @transform_9(%arg0: i32) -> (i32, i32) {
    %c0_i32 = arith.constant 0 : i32
    %c0_i32_0 = arith.constant 0 : i32
    %c0_i32_1 = arith.constant 0 : i32
    return %c0_i32, %c0_i32_0 : i32, i32
  }
  func.func @transform_10(%arg0: i32) -> (i32, i32) {
    %c0_i32 = arith.constant 0 : i32
    %c0_i32_0 = arith.constant 0 : i32
    return %arg0, %c0_i32 : i32, i32
  }
}

</mosaic_0001>

<llo_original>
// kernel: tpu_custom_call.1
$region0: #{tpu_custom_call.1}
  #allocation0 [shape = 'u32[]', space=smem, size = 0x4, offset = 0x4, fixed_abs, tag = 'smem constant byte address 0x4 - core index']
  #allocation1 [shape = 'u32[72,128]{1,0:T(1,128)}', space=vmem, size = 0x9000, scoped, tag = 'internal scratch']
  %s0 = inlined_call_operand.vmem [shape: f32[64,16], index: 0, kind: input, shape index: {}]
  %s1 = inlined_call_operand.vmem [shape: f32[64,1], index: 1, kind: input, shape index: {}]
  %s2 = inlined_call_operand.vmem [shape: f32[16,32], index: 2, kind: input, shape index: {}]
  %s3 = inlined_call_operand.vmem [shape: f32[32,32], index: 3, kind: input, shape index: {}]
  %s4 = inlined_call_operand.vmem [shape: f32[32,32], index: 4, kind: input, shape index: {}]
  %s5 = inlined_call_operand.vmem [shape: f32[32,32], index: 5, kind: input, shape index: {}]
  %s6 = inlined_call_operand.vmem [shape: f32[32,32], index: 6, kind: input, shape index: {}]
  %s7 = inlined_call_operand.hbm [shape: f32[16,48], index: 7, kind: input, shape index: {}]
  %s8 = inlined_call_operand.vmem [shape: f32[4,32], index: 8, kind: input, shape index: {}]
  %s9 = inlined_call_operand.vmem [shape: f32[1,48], index: 9, kind: input, shape index: {}]
  %s10 = inlined_call_operand.vmem [shape: f32[64,24], index: 10, kind: output, shape index: {}]
  %s11 = sld [smem:[#allocation0]]
  $region77: #{tpu_custom_call.1} parent=0
    _
  %s13 = ssub.s32 1, %s11
  %s14 = scalar_select 0, %s13, %s11
  $region1: #{tpu_custom_call.1} parent=0
    #allocation2 [shape = 'u8[8192]{0}', space=vmem, size = 0x2000, scoped, tag = 'input window, operand 7, single buffered']
    #allocation3 [shape = 's32[2]{0}', space=sflag, size = 0x8, scoped, tag = 'scoped memory for tpu_custom_call.1']
    %15 = vsyncpa [#allocation3], 0
    loop: start=0, step=1, limit=4
    $region2: #{tpu_custom_call.1} parent=1 // loop_pre_header
      _
    $region3: #{tpu_custom_call.1} parent=1 // loop_header
      %s17 = sphi 0, %s21
      %p18 = scmp.ge.s32.totalorder %s17, 4
      %s27 = sphi 0, %s29
      %s30 = sphi 0, %s27
      %s31 = sphi 0, %s30
      %s47 = sphi 0, %s31
      %s53 = sphi 0, %s55
      %s56 = sphi 0, %s53
      %s57 = sphi 0, %s56
      %s73 = sphi 0, %s57
      %s77 = sphi 0, %s77
      %s79 = sphi 0, %s77
      %s80 = sphi 0, %s79
      %s94 = sphi 0, %s80
      %s98 = sphi 0, %s98
      %s100 = sphi 0, %s98
      %s101 = sphi 0, %s100
      %s115 = sphi 0, %s101
      %s119 = sphi 0, %s119
      %s121 = sphi 0, %s119
      %s122 = sphi 0, %s121
      %s136 = sphi 0, %s122
      %s140 = sphi 0, %s140
      %s142 = sphi 0, %s140
      %s143 = sphi 0, %s142
      %s157 = sphi 0, %s143
      %s161 = sphi 0, %s161
      %s163 = sphi 0, %s161
      %s164 = sphi 0, %s163
      %s178 = sphi 0, %s164
      %s182 = sphi 0, %s182
      %s184 = sphi 0, %s182
      %s185 = sphi 0, %s184
      %s199 = sphi 0, %s185
      %s203 = sphi 0, %s203
      %s205 = sphi 0, %s203
      %s206 = sphi 0, %s205
      %s220 = sphi 0, %s206
      %s224 = sphi 0, %s224
      %s226 = sphi 0, %s224
      %s227 = sphi 0, %s226
      %s241 = sphi 0, %s227
      %s247 = sphi 0, %s249
      %s250 = sphi 0, %s247
      %s251 = sphi 0, %s250
      %s267 = sphi 0, %s251
    $region4: #{tpu_custom_call.1} parent=1 // loop_header_branch
      %20 = sbr.rel (%p18) target = $region8
    $region5: #{tpu_custom_call.1} parent=1 // loop_body
      %s22 = ssub.s32 %s17, 1
      %s23 = ssub.s32 %s17, 2
      %s24 = sadd.s32 %s17, 1
      %s25 = ssub.s32 %s17, %s24
      %p26 = scmp.eq.s32.totalorder %s25, 0
      %s28 = sadd.s32 %s27, 1
      %s29 = scalar_select %p26, %s27, %s28
      %p32 = pneg %p26
      %p33 = scmp.eq.s32.totalorder %s17, 1
      %p34 = por %p32, %p33
      %p35 = scmp.ne.s32.totalorder %s27, %s30
      %p36 = scmp.eq.s32.totalorder %s17, 0
      %p37 = por %p35, %p36
      %p38 = scmp.ne.s32.totalorder %s27, %s30
      %p39 = scmp.eq.s32.totalorder %s22, 1
      %p40 = por %p38, %p39
      %p41 = scmp.ne.s32.totalorder %s30, %s31
      %p42 = scmp.eq.s32.totalorder %s22, 0
      %p43 = por %p41, %p42
      %p44 = scmp.ne.s32.totalorder %s30, %s31
      %p45 = scmp.eq.s32.totalorder %s23, 1
      %p46 = por %p44, %p45
      %p48 = scmp.ne.s32.totalorder %s31, %s47
      %p49 = scmp.eq.s32.totalorder %s23, 0
      %p50 = por %p48, %p49
      %s51 = ssub.s32 %s17, %s24
      %p52 = scmp.eq.s32.totalorder %s51, 0
      %s54 = sadd.s32 %s53, 1
      %s55 = scalar_select %p52, %s53, %s54
      %p58 = pneg %p52
      %p59 = scmp.eq.s32.totalorder %s17, 1
      %p60 = por %p58, %p59
      %p61 = scmp.ne.s32.totalorder %s53, %s56
      %p62 = scmp.eq.s32.totalorder %s17, 0
      %p63 = por %p61, %p62
      %p64 = scmp.ne.s32.totalorder %s53, %s56
      %p65 = scmp.eq.s32.totalorder %s22, 1
      %p66 = por %p64, %p65
      %p67 = scmp.ne.s32.totalorder %s56, %s57
      %p68 = scmp.eq.s32.totalorder %s22, 0
      %p69 = por %p67, %p68
      %p70 = scmp.ne.s32.totalorder %s56, %s57
      %p71 = scmp.eq.s32.totalorder %s23, 1
      %p72 = por %p70, %p71
      %p74 = scmp.ne.s32.totalorder %s57, %s73
      %p75 = scmp.eq.s32.totalorder %s23, 0
      %p76 = por %p74, %p75
      %s78 = sadd.s32 %s77, 1
      %p81 = scmp.eq.s32.totalorder %s17, 1
      %p82 = scmp.ne.s32.totalorder %s77, %s79
      %p83 = scmp.eq.s32.totalorder %s17, 0
      %p84 = por %p82, %p83
      %p85 = scmp.ne.s32.totalorder %s77, %s79
      %p86 = scmp.eq.s32.totalorder %s22, 1
      %p87 = por %p85, %p86
      %p88 = scmp.ne.s32.totalorder %s79, %s80
      %p89 = scmp.eq.s32.totalorder %s22, 0
      %p90 = por %p88, %p89
      %p91 = scmp.ne.s32.totalorder %s79, %s80
      %p92 = scmp.eq.s32.totalorder %s23, 1
      %p93 = por %p91, %p92
      %p95 = scmp.ne.s32.totalorder %s80, %s94
      %p96 = scmp.eq.s32.totalorder %s23, 0
      %p97 = por %p95, %p96
      %s99 = sadd.s32 %s98, 1
      %p102 = scmp.eq.s32.totalorder %s17, 1
      %p103 = scmp.ne.s32.totalorder %s98, %s100
      %p104 = scmp.eq.s32.totalorder %s17, 0
      %p105 = por %p103, %p104
      %p106 = scmp.ne.s32.totalorder %s98, %s100
      %p107 = scmp.eq.s32.totalorder %s22, 1
      %p108 = por %p106, %p107
      %p109 = scmp.ne.s32.totalorder %s100, %s101
      %p110 = scmp.eq.s32.totalorder %s22, 0
      %p111 = por %p109, %p110
      %p112 = scmp.ne.s32.totalorder %s100, %s101
      %p113 = scmp.eq.s32.totalorder %s23, 1
      %p114 = por %p112, %p113
      %p116 = scmp.ne.s32.totalorder %s101, %s115
      %p117 = scmp.eq.s32.totalorder %s23, 0
      %p118 = por %p116, %p117
      %s120 = sadd.s32 %s119, 1
      %p123 = scmp.eq.s32.totalorder %s17, 1
      %p124 = scmp.ne.s32.totalorder %s119, %s121
      %p125 = scmp.eq.s32.totalorder %s17, 0
      %p126 = por %p124, %p125
      %p127 = scmp.ne.s32.totalorder %s119, %s121
      %p128 = scmp.eq.s32.totalorder %s22, 1
      %p129 = por %p127, %p128
      %p130 = scmp.ne.s32.totalorder %s121, %s122
      %p131 = scmp.eq.s32.totalorder %s22, 0
      %p132 = por %p130, %p131
      %p133 = scmp.ne.s32.totalorder %s121, %s122
      %p134 = scmp.eq.s32.totalorder %s23, 1
      %p135 = por %p133, %p134
      %p137 = scmp.ne.s32.totalorder %s122, %s136
      %p138 = scmp.eq.s32.totalorder %s23, 0
      %p139 = por %p137, %p138
      %s141 = sadd.s32 %s140, 1
      %p144 = scmp.eq.s32.totalorder %s17, 1
      %p145 = scmp.ne.s32.totalorder %s140, %s142
      %p146 = scmp.eq.s32.totalorder %s17, 0
      %p147 = por %p145, %p146
      %p148 = scmp.ne.s32.totalorder %s140, %s142
      %p149 = scmp.eq.s32.totalorder %s22, 1
      %p150 = por %p148, %p149
      %p151 = scmp.ne.s32.totalorder %s142, %s143
      %p152 = scmp.eq.s32.totalorder %s22, 0
      %p153 = por %p151, %p152
      %p154 = scmp.ne.s32.totalorder %s142, %s143
      %p155 = scmp.eq.s32.totalorder %s23, 1
      %p156 = por %p154, %p155
      %p158 = scmp.ne.s32.totalorder %s143, %s157
      %p159 = scmp.eq.s32.totalorder %s23, 0
      %p160 = por %p158, %p159
      %s162 = sadd.s32 %s161, 1
      %p165 = scmp.eq.s32.totalorder %s17, 1
      %p166 = scmp.ne.s32.totalorder %s161, %s163
      %p167 = scmp.eq.s32.totalorder %s17, 0
      %p168 = por %p166, %p167
      %p169 = scmp.ne.s32.totalorder %s161, %s163
      %p170 = scmp.eq.s32.totalorder %s22, 1
      %p171 = por %p169, %p170
      %p172 = scmp.ne.s32.totalorder %s163, %s164
      %p173 = scmp.eq.s32.totalorder %s22, 0
      %p174 = por %p172, %p173
      %p175 = scmp.ne.s32.totalorder %s163, %s164
      %p176 = scmp.eq.s32.totalorder %s23, 1
      %p177 = por %p175, %p176
      %p179 = scmp.ne.s32.totalorder %s164, %s178
      %p180 = scmp.eq.s32.totalorder %s23, 0
      %p181 = por %p179, %p180
      %s183 = sadd.s32 %s182, 1
      %p186 = scmp.eq.s32.totalorder %s17, 1
      %p187 = scmp.ne.s32.totalorder %s182, %s184
      %p188 = scmp.eq.s32.totalorder %s17, 0
      %p189 = por %p187, %p188
      %p190 = scmp.ne.s32.totalorder %s182, %s184
      %p191 = scmp.eq.s32.totalorder %s22, 1
      %p192 = por %p190, %p191
      %p193 = scmp.ne.s32.totalorder %s184, %s185
      %p194 = scmp.eq.s32.totalorder %s22, 0
      %p195 = por %p193, %p194
      %p196 = scmp.ne.s32.totalorder %s184, %s185
      %p197 = scmp.eq.s32.totalorder %s23, 1
      %p198 = por %p196, %p197
      %p200 = scmp.ne.s32.totalorder %s185, %s199
      %p201 = scmp.eq.s32.totalorder %s23, 0
      %p202 = por %p200, %p201
      %s204 = sadd.s32 %s203, 1
      %p207 = scmp.eq.s32.totalorder %s17, 1
      %p208 = scmp.ne.s32.totalorder %s203, %s205
      %p209 = scmp.eq.s32.totalorder %s17, 0
      %p210 = por %p208, %p209
      %p211 = scmp.ne.s32.totalorder %s203, %s205
      %p212 = scmp.eq.s32.totalorder %s22, 1
      %p213 = por %p211, %p212
      %p214 = scmp.ne.s32.totalorder %s205, %s206
      %p215 = scmp.eq.s32.totalorder %s22, 0
      %p216 = por %p214, %p215
      %p217 = scmp.ne.s32.totalorder %s205, %s206
      %p218 = scmp.eq.s32.totalorder %s23, 1
      %p219 = por %p217, %p218
      %p221 = scmp.ne.s32.totalorder %s206, %s220
      %p222 = scmp.eq.s32.totalorder %s23, 0
      %p223 = por %p221, %p222
      %s225 = sadd.s32 %s224, 1
      %p228 = scmp.eq.s32.totalorder %s17, 1
      %p229 = scmp.ne.s32.totalorder %s224, %s226
      %p230 = scmp.eq.s32.totalorder %s17, 0
      %p231 = por %p229, %p230
      %p232 = scmp.ne.s32.totalorder %s224, %s226
      %p233 = scmp.eq.s32.totalorder %s22, 1
      %p234 = por %p232, %p233
      %p235 = scmp.ne.s32.totalorder %s226, %s227
      %p236 = scmp.eq.s32.totalorder %s22, 0
      %p237 = por %p235, %p236
      %p238 = scmp.ne.s32.totalorder %s226, %s227
      %p239 = scmp.eq.s32.totalorder %s23, 1
      %p240 = por %p238, %p239
      %p242 = scmp.ne.s32.totalorder %s227, %s241
      %p243 = scmp.eq.s32.totalorder %s23, 0
      %p244 = por %p242, %p243
      %s245 = ssub.s32 %s17, %s24
      %p246 = scmp.eq.s32.totalorder %s245, 0
      %s248 = sadd.s32 %s247, 1
      %s249 = scalar_select %p246, %s247, %s248
      %p252 = pneg %p246
      %p253 = scmp.eq.s32.totalorder %s17, 1
      %p254 = por %p252, %p253
      %p255 = scmp.ne.s32.totalorder %s247, %s250
      %p256 = scmp.eq.s32.totalorder %s17, 0
      %p257 = por %p255, %p256
      %p258 = scmp.ne.s32.totalorder %s247, %s250
      %p259 = scmp.eq.s32.totalorder %s22, 1
      %p260 = por %p258, %p259
      %p261 = scmp.ne.s32.totalorder %s250, %s251
      %p262 = scmp.eq.s32.totalorder %s22, 0
      %p263 = por %p261, %p262
      %p264 = scmp.ne.s32.totalorder %s250, %s251
      %p265 = scmp.eq.s32.totalorder %s23, 1
      %p266 = por %p264, %p265
      %p268 = scmp.ne.s32.totalorder %s251, %s267
      %p269 = scmp.eq.s32.totalorder %s23, 0
      %p270 = por %p268, %p269
      %p271 = scmp.le.s32.totalorder 1, %s17
      %p272 = scmp.lt.s32.totalorder %s17, 3
      %p273 = pnand %p271, %p272
      %p274 = pneg %p273
      // Predicated region
      $region9: #{tpu_custom_call.1} parent=5 // pred_check
        _
      $region10: #{tpu_custom_call.1} parent=5 // pred_check_branch
        %276 = sbr.rel (%p273) target = $region12
      $region11: #{tpu_custom_call.1} parent=5 // pred_region
        %s277 = ssub.s32 %s17, 1
        // Predicated region
        $region13: #{tpu_custom_call.1} parent=11 // pred_check
          %p278 = pneg %p90
        $region14: #{tpu_custom_call.1} parent=11 // pred_check_branch
          %280 = sbr.rel (%p278) target = $region16
        $region15: #{tpu_custom_call.1} parent=11 // pred_region
          _
        $region16: #{tpu_custom_call.1} parent=11 // pred_fallthru
          _
        // Predicated region
        $region17: #{tpu_custom_call.1} parent=11 // pred_check
          %p281 = pneg %p111
        $region18: #{tpu_custom_call.1} parent=11 // pred_check_branch
          %283 = sbr.rel (%p281) target = $region20
        $region19: #{tpu_custom_call.1} parent=11 // pred_region
          _
        $region20: #{tpu_custom_call.1} parent=11 // pred_fallthru
          _
        // Predicated region
        $region21: #{tpu_custom_call.1} parent=11 // pred_check
          %p284 = pneg %p132
        $region22: #{tpu_custom_call.1} parent=11 // pred_check_branch
          %286 = sbr.rel (%p284) target = $region24
        $region23: #{tpu_custom_call.1} parent=11 // pred_region
          _
        $region24: #{tpu_custom_call.1} parent=11 // pred_fallthru
          _
        // Predicated region
        $region25: #{tpu_custom_call.1} parent=11 // pred_check
          %p287 = pneg %p153
        $region26: #{tpu_custom_call.1} parent=11 // pred_check_branch
          %289 = sbr.rel (%p287) target = $region28
        $region27: #{tpu_custom_call.1} parent=11 // pred_region
          _
        $region28: #{tpu_custom_call.1} parent=11 // pred_fallthru
          _
        // Predicated region
        $region29: #{tpu_custom_call.1} parent=11 // pred_check
          %p290 = pneg %p174
        $region30: #{tpu_custom_call.1} parent=11 // pred_check_branch
          %292 = sbr.rel (%p290) target = $region32
        $region31: #{tpu_custom_call.1} parent=11 // pred_region
          _
        $region32: #{tpu_custom_call.1} parent=11 // pred_fallthru
          _
        // Predicated region
        $region33: #{tpu_custom_call.1} parent=11 // pred_check
          %p293 = pneg %p195
        $region34: #{tpu_custom_call.1} parent=11 // pred_check_branch
          %295 = sbr.rel (%p293) target = $region36
        $region35: #{tpu_custom_call.1} parent=11 // pred_region
          %297 = vsyncadd [#allocation3], 0
          %s298 = sshll.u32 %s7, 4
          %s299 = int_to_ptr.hbm [resolvable:$true] %s298
          %s300 = sshll.u32 [#allocation2], 4
          %s301 = int_to_ptr.vmem [resolvable:$true] %s300
          %306 = dma.hbm_to_vmem [thread:$0]  %s299, 256, %s301, [#allocation3], 128, 128, 8
        $region36: #{tpu_custom_call.1} parent=11 // pred_fallthru
          _
        // Predicated region
        $region37: #{tpu_custom_call.1} parent=11 // pred_check
          %p307 = pneg %p216
        $region38: #{tpu_custom_call.1} parent=11 // pred_check_branch
          %309 = sbr.rel (%p307) target = $region40
        $region39: #{tpu_custom_call.1} parent=11 // pred_region
          _
        $region40: #{tpu_custom_call.1} parent=11 // pred_fallthru
          _
        // Predicated region
        $region41: #{tpu_custom_call.1} parent=11 // pred_check
          %p310 = pneg %p237
        $region42: #{tpu_custom_call.1} parent=11 // pred_check_branch
          %312 = sbr.rel (%p310) target = $region44
        $region43: #{tpu_custom_call.1} parent=11 // pred_region
          _
        $region44: #{tpu_custom_call.1} parent=11 // pred_fallthru
          _
      $region12: #{tpu_custom_call.1} parent=5 // pred_fallthru
        _
      %p313 = scmp.lt.s32.totalorder %s17, 2
      // Predicated region
      $region45: #{tpu_custom_call.1} parent=5 // pred_check
        %p314 = pneg %p313
      $region46: #{tpu_custom_call.1} parent=5 // pred_check_branch
        %316 = sbr.rel (%p314) target = $region48
      $region47: #{tpu_custom_call.1} parent=5 // pred_region
        // Predicated region
        $region49: #{tpu_custom_call.1} parent=47 // pred_check
          %p317 = pneg %p37
        $region50: #{tpu_custom_call.1} parent=47 // pred_check_branch
          %319 = sbr.rel (%p317) target = $region52
        $region51: #{tpu_custom_call.1} parent=47 // pred_region
          %s320 = smul.u32 4, %s17
          %p321 = scmp.lt.s32.totalorder %s320, 7
          %s322 = scalar_select %p321, %s320, 7
          %s323 = smul.addr %s322, 8
          %s324 = scalar_lea.vmem %s0, %s323
          %s325 = smul.u32 4, %s17
        $region52: #{tpu_custom_call.1} parent=47 // pred_fallthru
          _
        // Predicated region
        $region53: #{tpu_custom_call.1} parent=47 // pred_check
          %p326 = pneg %p63
        $region54: #{tpu_custom_call.1} parent=47 // pred_check_branch
          %328 = sbr.rel (%p326) target = $region56
        $region55: #{tpu_custom_call.1} parent=47 // pred_region
          %s329 = smul.u32 4, %s17
          %p330 = scmp.lt.s32.totalorder %s329, 7
          %s331 = scalar_select %p330, %s329, 7
          %s332 = smul.addr %s331, 8
          %s333 = scalar_lea.vmem %s1, %s332
          %s334 = smul.u32 4, %s17
        $region56: #{tpu_custom_call.1} parent=47 // pred_fallthru
          _
      $region48: #{tpu_custom_call.1} parent=5 // pred_fallthru
        _
      %p335 = scmp.le.s32.totalorder 1, %s17
      %p336 = scmp.lt.s32.totalorder %s17, 3
      %p337 = pnand %p335, %p336
      %p338 = pneg %p337
      // Predicated region
      $region57: #{tpu_custom_call.1} parent=5 // pred_check
        _
      $region58: #{tpu_custom_call.1} parent=5 // pred_check_branch
        %340 = sbr.rel (%p337) target = $region60
      $region59: #{tpu_custom_call.1} parent=5 // pred_region
        %s341 = ssub.s32 %s17, 1
        // Predicated region
        $region61: #{tpu_custom_call.1} parent=59 // pred_check
          %p342 = pneg %p195
        $region62: #{tpu_custom_call.1} parent=59 // pred_check_branch
          %344 = sbr.rel (%p342) target = $region64
        $region63: #{tpu_custom_call.1} parent=59 // pred_region
          %346 = dma.done [#allocation3], 256
        $region64: #{tpu_custom_call.1} parent=59 // pred_fallthru
          _
        %s347 = smul.u32 4, %s22
        %p348 = scmp.lt.s32.totalorder %s347, 7
        %s349 = scalar_select %p348, %s347, 7
        %s350 = smul.addr %s349, 8
        %s351 = scalar_lea.vmem %s0, %s350
        %p352 = pneg %p43
        %p353 = pneg %p40
        %s354 = smul.u32 4, %s22
        %p355 = scmp.lt.s32.totalorder %s354, 7
        %s356 = scalar_select %p355, %s354, 7
        %s357 = smul.addr %s356, 8
        %s358 = scalar_lea.vmem %s1, %s357
        %p359 = pneg %p69
        %p360 = pneg %p66
        %p361 = pneg %p90
        %p362 = pneg %p87
        %p363 = pneg %p111
        %p364 = pneg %p108
        %p365 = pneg %p132
        %p366 = pneg %p129
        %p367 = pneg %p153
        %p368 = pneg %p150
        %p369 = pneg %p174
        %p370 = pneg %p171
        %p371 = pneg %p195
        %p372 = pneg %p192
        %p373 = pneg %p216
        %p374 = pneg %p213
        %p375 = pneg %p237
        %p376 = pneg %p234
        %p377 = pneg %p263
        %p378 = pneg %p260
        %s379 = smul.u32 4, %s22
        %p380 = scmp.lt.s32.totalorder %s379, 7
        %s381 = scalar_select %p380, %s379, 7
        %s382 = smul.addr %s381, 8
        %s383 = scalar_lea.vmem %s10, %s382
        %s384 = smul.u32 4, %s22
        %p385 = scmp.lt.s32.totalorder %s384, 7
        %s386 = scalar_select %p385, %s384, 7
        %s387 = smul.addr %s386, 8
        %s388 = scalar_lea.vmem %s0, %s387
        %s389 = smul.u32 4, %s22
        %s390 = smul.u32 4, %s22
        %p391 = scmp.lt.s32.totalorder %s390, 7
        %s392 = scalar_select %p391, %s390, 7
        %s393 = smul.addr %s392, 8
        %s394 = scalar_lea.vmem %s1, %s393
        %s395 = smul.u32 4, %s22
        %s396 = smul.u32 4, %s22
        %p397 = scmp.lt.s32.totalorder %s396, 7
        %s398 = scalar_select %p397, %s396, 7
        %s399 = smul.addr %s398, 8
        %s400 = scalar_lea.vmem %s10, %s399
        %s401 = smul.u32 4, %s22
        %v402 = vld [vmem:[%s388] sm:$0xff]
        %v403 = vld [vmem:[%s388 + $0x8] sm:$0xff]
        %v404 = vld [vmem:[%s388 + $0x10] sm:$0xff]
        %v405 = vld [vmem:[%s388 + $0x18] sm:$0xff]
        %v406 = vld [vmem:[%s394] sm:$0xff]
        %v407 = vld [vmem:[%s394 + $0x8] sm:$0xff]
        %v408 = vld [vmem:[%s394 + $0x10] sm:$0xff]
        %v409 = vld [vmem:[%s394 + $0x18] sm:$0xff]
        %v410 = vsub.f32 1.0, %v406
        %v411 = vsub.f32 1.0, %v407
        %v412 = vsub.f32 1.0, %v408
        %v413 = vsub.f32 1.0, %v409
        %v414 = vld [vmem:[%s8] sm:$0x1]
        %v415 = vld [vmem:[%s8 + $0x1] sm:$0x1]
        %v416 = vld [vmem:[%s8 + $0x2] sm:$0x1]
        %v417 = vld [vmem:[%s8 + $0x3] sm:$0x1]
        %v418 = vld [vmem:[%s2] sm:$0xff]
        %v419 = vld [vmem:[%s2 + $0x8] sm:$0xff]
        %v420 = vperm.slane %v414, 0
        %vm421 = vcmask 130048
        %v423 = vsel %vm421, %v402, 0
        %v426 = vsel %vm421, %v403, 0
        %v429 = vsel %vm421, %v404, 0
        %v432 = vsel %vm421, %v405, 0
        %434 = vmatpush.msra.mxu0 0.0
        %435 = vmatpush.msra.mxu0 0.0
        %436 = vmatpush.msra.mxu0 0.0
        %437 = vmatpush.msra.mxu0 0.0
        %438 = vmatpush.msra.mxu0 0.0
        %439 = vmatpush.msra.mxu0 0.0
        %440 = vmatpush.msra.mxu0 0.0
        %441 = vmatpush.msra.mxu0 0.0
        %442 = vmatpush.msra.mxu0 0.0
        %443 = vmatpush.msra.mxu0 0.0
        %444 = vmatpush.msra.mxu0 0.0
        %445 = vmatpush.msra.mxu0 0.0
        %446 = vmatpush.msra.mxu0 0.0
        %447 = vmatpush.msra.mxu0 0.0
        %448 = vmatpush.msra.mxu0 %v419
        %449 = vmatpush.msra.mxu0 %v418
        %450 = vmatmul.f32.gmra.mxu0 %v423
        %v451 = vpop.f32.mrf.mxu0
        %v452 = vadd.f32 %v420, %v451
        %453 = vmatmul.f32.gmra.mxu0 %v426
        %v454 = vpop.f32.mrf.mxu0
        %v455 = vadd.f32 %v420, %v454
        %456 = vmatmul.f32.gmra.mxu0 %v429
        %v457 = vpop.f32.mrf.mxu0
        %v458 = vadd.f32 %v420, %v457
        %459 = vmatmul.f32.gmra.mxu0 %v432
        %v460 = vpop.f32.mrf.mxu0
        %v461 = vadd.f32 %v420, %v460
        %462 = vdwg.mxu0
        %vm463 = vcmp.ge.f32.partialorder %v452, 0.0
        %vm464 = vcmp.ge.f32.partialorder %v455, 0.0
        %vm465 = vcmp.ge.f32.partialorder %v458, 0.0
        %vm466 = vcmp.ge.f32.partialorder %v461, 0.0
        %v467 = vmul.f32 %v452, 0.01
        %v468 = vmul.f32 %v455, 0.01
        %v469 = vmul.f32 %v458, 0.01
        %v470 = vmul.f32 %v461, 0.01
        %v471 = vsel %vm463, %v452, %v467
        %v472 = vsel %vm464, %v455, %v468
        %v473 = vsel %vm465, %v458, %v469
        %v474 = vsel %vm466, %v461, %v470
        %v475 = vld [vmem:[%s3] sm:$0xff]
        %v476 = vld [vmem:[%s3 + $0x8] sm:$0xff]
        %v477 = vld [vmem:[%s3 + $0x10] sm:$0xff]
        %v478 = vld [vmem:[%s3 + $0x18] sm:$0xff]
        %vm479 = vcmask 261120
        %v481 = vsel %vm479, %v471, 0
        %v484 = vsel %vm479, %v472, 0
        %v487 = vsel %vm479, %v473, 0
        %v490 = vsel %vm479, %v474, 0
        %492 = vmatpush.msra.mxu0 0.0
        %493 = vmatpush.msra.mxu0 0.0
        %494 = vmatpush.msra.mxu0 0.0
        %495 = vmatpush.msra.mxu0 0.0
        %496 = vmatpush.msra.mxu0 0.0
        %497 = vmatpush.msra.mxu0 0.0
        %498 = vmatpush.msra.mxu0 0.0
        %499 = vmatpush.msra.mxu0 0.0
        %500 = vmatpush.msra.mxu0 0.0
        %501 = vmatpush.msra.mxu0 0.0
        %502 = vmatpush.msra.mxu0 0.0
        %503 = vmatpush.msra.mxu0 0.0
        %504 = vmatpush.msra.mxu0 %v478
        %505 = vmatpush.msra.mxu0 %v477
        %506 = vmatpush.msra.mxu0 %v476
        %507 = vmatpush.msra.mxu0 %v475
        %508 = vmatmul.f32.gmra.mxu0 %v481
        %v509 = vpop.f32.mrf.mxu0
        %v510 = vadd.f32 0.0, %v509
        %511 = vmatmul.f32.gmra.mxu0 %v484
        %v512 = vpop.f32.mrf.mxu0
        %v513 = vadd.f32 0.0, %v512
        %514 = vmatmul.f32.gmra.mxu0 %v487
        %v515 = vpop.f32.mrf.mxu0
        %v516 = vadd.f32 0.0, %v515
        %517 = vmatmul.f32.gmra.mxu0 %v490
        %v518 = vpop.f32.mrf.mxu0
        %v519 = vadd.f32 0.0, %v518
        %520 = vdwg.mxu0
        %v521 = vadd.f32 %v452, %v510
        %v522 = vadd.f32 %v455, %v513
        %v523 = vadd.f32 %v458, %v516
        %v524 = vadd.f32 %v461, %v519
        %v525 = vperm.slane %v415, 0
        %v526 = vadd.f32 %v521, %v525
        %v527 = vadd.f32 %v522, %v525
        %v528 = vadd.f32 %v523, %v525
        %v529 = vadd.f32 %v524, %v525
        %vm530 = vcmp.ge.f32.partialorder %v526, 0.0
        %vm531 = vcmp.ge.f32.partialorder %v527, 0.0
        %vm532 = vcmp.ge.f32.partialorder %v528, 0.0
        %vm533 = vcmp.ge.f32.partialorder %v529, 0.0
        %v534 = vmul.f32 %v526, 0.01
        %v535 = vmul.f32 %v527, 0.01
        %v536 = vmul.f32 %v528, 0.01
        %v537 = vmul.f32 %v529, 0.01
        %v538 = vsel %vm530, %v526, %v534
        %v539 = vsel %vm531, %v527, %v535
        %v540 = vsel %vm532, %v528, %v536
        %v541 = vsel %vm533, %v529, %v537
        %v542 = vld [vmem:[%s4] sm:$0xff]
        %v543 = vld [vmem:[%s4 + $0x8] sm:$0xff]
        %v544 = vld [vmem:[%s4 + $0x10] sm:$0xff]
        %v545 = vld [vmem:[%s4 + $0x18] sm:$0xff]
        %v546 = vld [vmem:[%s5] sm:$0xff]
        %v547 = vld [vmem:[%s5 + $0x8] sm:$0xff]
        %v548 = vld [vmem:[%s5 + $0x10] sm:$0xff]
        %v549 = vld [vmem:[%s5 + $0x18] sm:$0xff]
        %v551 = vsel %vm479, %v526, 0
        %v554 = vsel %vm479, %v527, 0
        %v557 = vsel %vm479, %v528, 0
        %v560 = vsel %vm479, %v529, 0
        %562 = vmatpush.msra.mxu0 0.0
        %563 = vmatpush.msra.mxu0 0.0
        %564 = vmatpush.msra.mxu0 0.0
        %565 = vmatpush.msra.mxu0 0.0
        %566 = vmatpush.msra.mxu0 0.0
        %567 = vmatpush.msra.mxu0 0.0
        %568 = vmatpush.msra.mxu0 0.0
        %569 = vmatpush.msra.mxu0 0.0
        %570 = vmatpush.msra.mxu0 0.0
        %571 = vmatpush.msra.mxu0 0.0
        %572 = vmatpush.msra.mxu0 0.0
        %573 = vmatpush.msra.mxu0 0.0
        %574 = vmatpush.msra.mxu0 %v549
        %575 = vmatpush.msra.mxu0 %v548
        %576 = vmatpush.msra.mxu0 %v547
        %577 = vmatpush.msra.mxu0 %v546
        %578 = vmatmul.f32.gmra.mxu0 %v551
        %v579 = vpop.f32.mrf.mxu0
        %v580 = vadd.f32 0.0, %v579
        %581 = vmatmul.f32.gmra.mxu0 %v554
        %v582 = vpop.f32.mrf.mxu0
        %v583 = vadd.f32 0.0, %v582
        %584 = vmatmul.f32.gmra.mxu0 %v557
        %v585 = vpop.f32.mrf.mxu0
        %v586 = vadd.f32 0.0, %v585
        %587 = vmatmul.f32.gmra.mxu0 %v560
        %v588 = vpop.f32.mrf.mxu0
        %v589 = vadd.f32 0.0, %v588
        %590 = vdwg.mxu0
        %v592 = vsel %vm479, %v538, 0
        %v595 = vsel %vm479, %v539, 0
        %v598 = vsel %vm479, %v540, 0
        %v601 = vsel %vm479, %v541, 0
        %603 = vmatpush.msra.mxu0 0.0
        %604 = vmatpush.msra.mxu0 0.0
        %605 = vmatpush.msra.mxu0 0.0
        %606 = vmatpush.msra.mxu0 0.0
        %607 = vmatpush.msra.mxu0 0.0
        %608 = vmatpush.msra.mxu0 0.0
        %609 = vmatpush.msra.mxu0 0.0
        %610 = vmatpush.msra.mxu0 0.0
        %611 = vmatpush.msra.mxu0 0.0
        %612 = vmatpush.msra.mxu0 0.0
        %613 = vmatpush.msra.mxu0 0.0
        %614 = vmatpush.msra.mxu0 0.0
        %615 = vmatpush.msra.mxu0 %v545
        %616 = vmatpush.msra.mxu0 %v544
        %617 = vmatpush.msra.mxu0 %v543
        %618 = vmatpush.msra.mxu0 %v542
        %619 = vmatmul.f32.gmra.mxu0 %v592
        %v620 = vpop.f32.mrf.mxu0
        %v621 = vadd.f32 %v580, %v620
        %622 = vmatmul.f32.gmra.mxu0 %v595
        %v623 = vpop.f32.mrf.mxu0
        %v624 = vadd.f32 %v583, %v623
        %625 = vmatmul.f32.gmra.mxu0 %v598
        %v626 = vpop.f32.mrf.mxu0
        %v627 = vadd.f32 %v586, %v626
        %628 = vmatmul.f32.gmra.mxu0 %v601
        %v629 = vpop.f32.mrf.mxu0
        %v630 = vadd.f32 %v589, %v629
        %631 = vdwg.mxu0
        %v632 = vperm.slane %v416, 0
        %v633 = vadd.f32 %v621, %v632
        %v634 = vadd.f32 %v624, %v632
        %v635 = vadd.f32 %v627, %v632
        %v636 = vadd.f32 %v630, %v632
        %vm637 = vcmp.ge.f32.partialorder %v633, 0.0
        %vm638 = vcmp.ge.f32.partialorder %v634, 0.0
        %vm639 = vcmp.ge.f32.partialorder %v635, 0.0
        %vm640 = vcmp.ge.f32.partialorder %v636, 0.0
        %v641 = vmul.f32 %v633, 0.01
        %v642 = vmul.f32 %v634, 0.01
        %v643 = vmul.f32 %v635, 0.01
        %v644 = vmul.f32 %v636, 0.01
        %v645 = vsel %vm637, %v633, %v641
        %v646 = vsel %vm638, %v634, %v642
        %v647 = vsel %vm639, %v635, %v643
        %v648 = vsel %vm640, %v636, %v644
        %v649 = vld [vmem:[%s6] sm:$0xff]
        %v650 = vld [vmem:[%s6 + $0x8] sm:$0xff]
        %v651 = vld [vmem:[%s6 + $0x10] sm:$0xff]
        %v652 = vld [vmem:[%s6 + $0x18] sm:$0xff]
        %v654 = vsel %vm479, %v645, 0
        %v657 = vsel %vm479, %v646, 0
        %v660 = vsel %vm479, %v647, 0
        %v663 = vsel %vm479, %v648, 0
        %665 = vmatpush.msra.mxu0 0.0
        %666 = vmatpush.msra.mxu0 0.0
        %667 = vmatpush.msra.mxu0 0.0
        %668 = vmatpush.msra.mxu0 0.0
        %669 = vmatpush.msra.mxu0 0.0
        %670 = vmatpush.msra.mxu0 0.0
        %671 = vmatpush.msra.mxu0 0.0
        %672 = vmatpush.msra.mxu0 0.0
        %673 = vmatpush.msra.mxu0 0.0
        %674 = vmatpush.msra.mxu0 0.0
        %675 = vmatpush.msra.mxu0 0.0
        %676 = vmatpush.msra.mxu0 0.0
        %677 = vmatpush.msra.mxu0 %v652
        %678 = vmatpush.msra.mxu0 %v651
        %679 = vmatpush.msra.mxu0 %v650
        %680 = vmatpush.msra.mxu0 %v649
        %681 = vmatmul.f32.gmra.mxu0 %v654
        %v682 = vpop.f32.mrf.mxu0
        %v683 = vadd.f32 0.0, %v682
        %684 = vmatmul.f32.gmra.mxu0 %v657
        %v685 = vpop.f32.mrf.mxu0
        %v686 = vadd.f32 0.0, %v685
        %687 = vmatmul.f32.gmra.mxu0 %v660
        %v688 = vpop.f32.mrf.mxu0
        %v689 = vadd.f32 0.0, %v688
        %690 = vmatmul.f32.gmra.mxu0 %v663
        %v691 = vpop.f32.mrf.mxu0
        %v692 = vadd.f32 0.0, %v691
        %693 = vdwg.mxu0
        %v694 = vadd.f32 %v633, %v683
        %v695 = vadd.f32 %v634, %v686
        %v696 = vadd.f32 %v635, %v689
        %v697 = vadd.f32 %v636, %v692
        %v698 = vperm.slane %v417, 0
        %v699 = vadd.f32 %v694, %v698
        %v700 = vadd.f32 %v695, %v698
        %v701 = vadd.f32 %v696, %v698
        %v702 = vadd.f32 %v697, %v698
        %vm703 = vcmp.ge.f32.partialorder %v699, 0.0
        %vm704 = vcmp.ge.f32.partialorder %v700, 0.0
        %vm705 = vcmp.ge.f32.partialorder %v701, 0.0
        %vm706 = vcmp.ge.f32.partialorder %v702, 0.0
        %v707 = vmul.f32 %v699, 0.01
        %v708 = vmul.f32 %v700, 0.01
        %v709 = vmul.f32 %v701, 0.01
        %v710 = vmul.f32 %v702, 0.01
        %v711 = vsel %vm703, %v699, %v707
        %v712 = vsel %vm704, %v700, %v708
        %v713 = vsel %vm705, %v701, %v709
        %v714 = vsel %vm706, %v702, %v710
        %716 = vset.pattern.permute.xlu0 0
        %717 = vperm.xlu0 %716, %v410
        %v718 = vpop.permute.xlu0 %717
        %721 = vset.pattern.permute.xlu0 0
        %722 = vperm.xlu0 %721, %v411
        %v723 = vpop.permute.xlu0 %722
        %726 = vset.pattern.permute.xlu0 0
        %727 = vperm.xlu0 %726, %v412
        %v728 = vpop.permute.xlu0 %727
        %731 = vset.pattern.permute.xlu0 0
        %732 = vperm.xlu0 %731, %v413
        %v733 = vpop.permute.xlu0 %732
        %v735 = vmul.f32 %v718, %v711
        %v736 = vmul.f32 %v723, %v712
        %v737 = vmul.f32 %v728, %v713
        %v738 = vmul.f32 %v733, %v714
        %740 = vset.pattern.permute.xlu0 0
        %741 = vperm.xlu0 %740, %v406
        %v742 = vpop.permute.xlu0 %741
        %745 = vset.pattern.permute.xlu0 0
        %746 = vperm.xlu0 %745, %v407
        %v747 = vpop.permute.xlu0 %746
        %750 = vset.pattern.permute.xlu0 0
        %751 = vperm.xlu0 %750, %v408
        %v752 = vpop.permute.xlu0 %751
        %755 = vset.pattern.permute.xlu0 0
        %756 = vperm.xlu0 %755, %v409
        %v757 = vpop.permute.xlu0 %756
        %v759 = vmul.f32 %v742, %v711
        %v760 = vmul.f32 %v747, %v712
        %v761 = vmul.f32 %v752, %v713
        %v762 = vmul.f32 %v757, %v714
        %767 = vrot.lane.b32.xlu0 %v759, 112
        %v768 = vpop.permute.xlu0 %767
        %769 = vrot.lane.b32.xlu0 %v760, 112
        %v770 = vpop.permute.xlu0 %769
        %771 = vrot.lane.b32.xlu0 %v761, 112
        %v772 = vpop.permute.xlu0 %771
        %773 = vrot.lane.b32.xlu0 %v762, 112
        %v774 = vpop.permute.xlu0 %773
        %v779 = vadd.f32 %v735, %v768
        %v780 = vadd.f32 %v736, %v770
        %v781 = vadd.f32 %v737, %v772
        %v782 = vadd.f32 %v738, %v774
        %v783 = vld [vmem:[#allocation2] sm:$0xff]
        %v784 = vld [vmem:[#allocation2 + $0x8] sm:$0xff]
        %v785 = vld [vmem:[%s9] sm:$0x1]
        %v787 = vperm.slane %v785, 0
        %v790 = vsel %vm421, %v779, 0
        %v793 = vsel %vm421, %v780, 0
        %v796 = vsel %vm421, %v781, 0
        %v799 = vsel %vm421, %v782, 0
        %801 = vmatpush.msra.mxu0 0.0
        %802 = vmatpush.msra.mxu0 0.0
        %803 = vmatpush.msra.mxu0 0.0
        %804 = vmatpush.msra.mxu0 0.0
        %805 = vmatpush.msra.mxu0 0.0
        %806 = vmatpush.msra.mxu0 0.0
        %807 = vmatpush.msra.mxu0 0.0
        %808 = vmatpush.msra.mxu0 0.0
        %809 = vmatpush.msra.mxu0 0.0
        %810 = vmatpush.msra.mxu0 0.0
        %811 = vmatpush.msra.mxu0 0.0
        %812 = vmatpush.msra.mxu0 0.0
        %813 = vmatpush.msra.mxu0 0.0
        %814 = vmatpush.msra.mxu0 0.0
        %815 = vmatpush.msra.mxu0 %v784
        %816 = vmatpush.msra.mxu0 %v783
        %817 = vmatmul.f32.gmra.mxu0 %v790
        %v818 = vpop.f32.mrf.mxu0
        %v819 = vadd.f32 %v787, %v818
        %820 = vmatmul.f32.gmra.mxu0 %v793
        %v821 = vpop.f32.mrf.mxu0
        %v822 = vadd.f32 %v787, %v821
        %823 = vmatmul.f32.gmra.mxu0 %v796
        %v824 = vpop.f32.mrf.mxu0
        %v825 = vadd.f32 %v787, %v824
        %826 = vmatmul.f32.gmra.mxu0 %v799
        %v827 = vpop.f32.mrf.mxu0
        %v828 = vadd.f32 %v787, %v827
        %829 = vdwg.mxu0
        %v830 = vlaneseq
        %v831 = vand.u32 %v830, 127
        %vm832 = vcmp.ge.s32.totalorder %v831, 16
        %v833 = vmax.f32 %v819, 0.0
        %v834 = vmax.f32 %v822, 0.0
        %v835 = vmax.f32 %v825, 0.0
        %v836 = vmax.f32 %v828, 0.0
        %v837 = vand.u32 2147483647, %v819
        %v838 = vand.u32 2147483647, %v822
        %v839 = vand.u32 2147483647, %v825
        %v840 = vand.u32 2147483647, %v828
        %v841 = vsub.f32 0.0, %v837
        %v842 = vsub.f32 0.0, %v838
        %v843 = vsub.f32 0.0, %v839
        %v844 = vsub.f32 0.0, %v840
        %v845 = vmul.f32 %v841, 1.442695
        %v846 = vpow.pop %v845
        %v847 = vmul.f32 %v842, 1.442695
        %v848 = vpow.pop %v847
        %v849 = vmul.f32 %v843, 1.442695
        %v850 = vpow.pop %v849
        %v851 = vmul.f32 %v844, 1.442695
        %v852 = vpow.pop %v851
        %v853 = vadd.f32 %v846, 1.0
        %v854 = vlog2.pop %v853
        %v855 = vmul.f32 %v854, 0.6931472
        %v856 = vmul.f32 -0.5, %v846
        %v857 = vadd.f32 %v856, 1.0
        %v858 = vmul.f32 %v857, %v846
        %v859 = vand.u32 2147483647, %v846
        %vm860 = vcmp.lt.f32.partialorder %v859, 0.0004427343
        %v861 = vsel %vm860, %v858, %v855
        %v862 = vadd.f32 %v848, 1.0
        %v863 = vlog2.pop %v862
        %v864 = vmul.f32 %v863, 0.6931472
        %v865 = vmul.f32 -0.5, %v848
        %v866 = vadd.f32 %v865, 1.0
        %v867 = vmul.f32 %v866, %v848
        %v868 = vand.u32 2147483647, %v848
        %vm869 = vcmp.lt.f32.partialorder %v868, 0.0004427343
        %v870 = vsel %vm869, %v867, %v864
        %v871 = vadd.f32 %v850, 1.0
        %v872 = vlog2.pop %v871
        %v873 = vmul.f32 %v872, 0.6931472
        %v874 = vmul.f32 -0.5, %v850
        %v875 = vadd.f32 %v874, 1.0
        %v876 = vmul.f32 %v875, %v850
        %v877 = vand.u32 2147483647, %v850
        %vm878 = vcmp.lt.f32.partialorder %v877, 0.0004427343
        %v879 = vsel %vm878, %v876, %v873
        %v880 = vadd.f32 %v852, 1.0
        %v881 = vlog2.pop %v880
        %v882 = vmul.f32 %v881, 0.6931472
        %v883 = vmul.f32 -0.5, %v852
        %v884 = vadd.f32 %v883, 1.0
        %v885 = vmul.f32 %v884, %v852
        %v886 = vand.u32 2147483647, %v852
        %vm887 = vcmp.lt.f32.partialorder %v886, 0.0004427343
        %v888 = vsel %vm887, %v885, %v882
        %v889 = vadd.f32 %v833, %v861
        %v890 = vadd.f32 %v834, %v870
        %v891 = vadd.f32 %v835, %v879
        %v892 = vadd.f32 %v836, %v888
        %v893 = vsel %vm832, %v889, %v819
        %v894 = vsel %vm832, %v890, %v822
        %v895 = vsel %vm832, %v891, %v825
        %v896 = vsel %vm832, %v892, %v828
        %901 = vrot.lane.b32.xlu0 %v889, 104
        %v902 = vpop.permute.xlu0 %901
        %903 = vrot.lane.b32.xlu0 %v890, 104
        %v904 = vpop.permute.xlu0 %903
        %905 = vrot.lane.b32.xlu0 %v891, 104
        %v906 = vpop.permute.xlu0 %905
        %907 = vrot.lane.b32.xlu0 %v892, 104
        %v908 = vpop.permute.xlu0 %907
        %917 = vrot.lane.b32.xlu0 %v819, 104
        %v918 = vpop.permute.xlu0 %917
        %919 = vrot.lane.b32.xlu0 %v822, 104
        %v920 = vpop.permute.xlu0 %919
        %921 = vrot.lane.b32.xlu0 %v825, 104
        %v922 = vpop.permute.xlu0 %921
        %923 = vrot.lane.b32.xlu0 %v828, 104
        %v924 = vpop.permute.xlu0 %923
        %v929 = vsel %vm832, %v902, %v918
        %v930 = vsel %vm832, %v904, %v920
        %v931 = vsel %vm832, %v906, %v922
        %v932 = vsel %vm832, %v908, %v924
        %v933 = vmul.f32 %v718, %v893
        %v934 = vmul.f32 %v723, %v894
        %v935 = vmul.f32 %v728, %v895
        %v936 = vmul.f32 %v733, %v896
        %v937 = vmul.f32 %v742, %v929
        %v938 = vmul.f32 %v747, %v930
        %v939 = vmul.f32 %v752, %v931
        %v940 = vmul.f32 %v757, %v932
        %v941 = vadd.f32 %v933, %v937
        %v942 = vadd.f32 %v934, %v938
        %v943 = vadd.f32 %v935, %v939
        %v944 = vadd.f32 %v936, %v940
        %v945 = vsel %vm832, 1e-07, 0.0
        %v946 = vadd.f32 %v941, %v945
        %v947 = vadd.f32 %v942, %v945
        %v948 = vadd.f32 %v943, %v945
        %v949 = vadd.f32 %v944, %v945
        %vm950 = vcmask 195584
        %951 = vst.msk [vmem:[%s400] sm:$0xff] %vm950, %v946
        %952 = vst.msk [vmem:[%s400 + $0x8] sm:$0xff] %vm950, %v947
        %953 = vst.msk [vmem:[%s400 + $0x10] sm:$0xff] %vm950, %v948
        %954 = vst.msk [vmem:[%s400 + $0x18] sm:$0xff] %vm950, %v949
        %s955 = smul.u32 4, %s22
        %p956 = scmp.lt.s32.totalorder %s955, 7
        %s957 = scalar_select %p956, %s955, 7
        %s958 = smul.addr %s957, 8
        %s959 = scalar_lea.vmem %s10, %s958
        // Predicated region
        $region65: #{tpu_custom_call.1} parent=59 // pred_check
          %p960 = pneg %p260
        $region66: #{tpu_custom_call.1} parent=59 // pred_check_branch
          %962 = sbr.rel (%p960) target = $region68
        $region67: #{tpu_custom_call.1} parent=59 // pred_region
          %s963 = smul.u32 4, %s22
        $region68: #{tpu_custom_call.1} parent=59 // pred_fallthru
          _
      $region60: #{tpu_custom_call.1} parent=5 // pred_fallthru
        _
      %p964 = scmp.le.s32.totalorder 2, %s17
      // Predicated region
      $region69: #{tpu_custom_call.1} parent=5 // pred_check
        %p965 = pneg %p964
      $region70: #{tpu_custom_call.1} parent=5 // pred_check_branch
        %967 = sbr.rel (%p965) target = $region72
      $region71: #{tpu_custom_call.1} parent=5 // pred_region
        %s968 = ssub.s32 %s17, 2
        // Predicated region
        $region73: #{tpu_custom_call.1} parent=71 // pred_check
          %p969 = pneg %p266
        $region74: #{tpu_custom_call.1} parent=71 // pred_check_branch
          %971 = sbr.rel (%p969) target = $region76
        $region75: #{tpu_custom_call.1} parent=71 // pred_region
          %s972 = smul.u32 4, %s23
          %p973 = scmp.lt.s32.totalorder %s972, 7
          %s974 = scalar_select %p973, %s972, 7
          %s975 = smul.addr %s974, 8
          %s976 = scalar_lea.vmem %s10, %s975
        $region76: #{tpu_custom_call.1} parent=71 // pred_fallthru
          _
      $region72: #{tpu_custom_call.1} parent=5 // pred_fallthru
        _
    $region6: #{tpu_custom_call.1} parent=1 // loop_footer
      %s21 = sadd.s32 1, %s17
    $region7: #{tpu_custom_call.1} parent=1 // loop_footer_branch
      %16 = sbr.rel target = $region3
    $region8: #{tpu_custom_call.1} parent=1 // loop_exit
      _
    %977 = vsyncpa [#allocation3], 1
    %s978 = scalar_lea.sflag [#allocation3], 1
    %979 = vsyncpa %s978, 1

</llo_original>
